<compile_context>
chip_gen: v7x
topology: tpu7x:2x2x1
jax: 0.10.0
libtpu: 0.0.40
codegen_flags: <defaults>
</compile_context>

<pallas_src>
import jax
import jax.numpy as jnp
import numpy as np
from jax.experimental import pallas as pl
from jax.experimental.pallas import tpu as pltpu

STATE_DIM = 32
H1 = 64
H2 = 88
H1_PAD = 128            # hidden dim lane-padded to a full 128-lane vreg / MXU tile
BN_EPS = 1e-5
FUSED_MAX_ROWS = 1024   # single fused-kernel path up to this many rows
MAX_BATCH_TILE = 2048   # per-tile row cap for the two-pass path (v7x VMEM safe)
VMEM_LIMIT = 32 * 1024 * 1024


def _elu(x):
    # ELU(alpha=1); exp runs on the EUP.  Kept f32 on all gens (v5e: no bf16 EUP).
    return jnp.where(x > 0, x, jnp.exp(jnp.minimum(x, 0.0)) - 1.0)


def _round_up(n, m):
    return ((n + m - 1) // m) * m


def _bn_scale_shift(s, ss, gamma, beta, inv_b):
    """Fold train-mode BatchNorm into per-feature scale/shift applied to
    h1 = x @ w1 (bias-free: BN cancels constant bias; var is shift-invariant)."""
    mean = s * inv_b
    var = jnp.maximum(ss * inv_b - mean * mean, 0.0)     # biased, one-pass
    scale = gamma * jax.lax.rsqrt(var + BN_EPS)          # padded lanes stay 0
    shift = beta - mean * scale                          # padded lanes stay 0
    return scale, shift


# ---------------------------------------------------------------------------
# Fused single-kernel path (whole batch in one tile)
# ---------------------------------------------------------------------------
def _make_fused_kernel(inv_b):
    def fused_kernel(x_ref, w1_ref, g_ref, beta_ref, w2_ref, b2_ref, o_ref):
        h1 = jnp.dot(x_ref[...].astype(jnp.bfloat16), w1_ref[...],
                     preferred_element_type=jnp.float32)
        # Padded (zero) x rows contribute exactly 0 to both sums.
        s = jnp.sum(h1, axis=0, keepdims=True)
        ss = jnp.sum(h1 * h1, axis=0, keepdims=True)
        scale, shift = _bn_scale_shift(s, ss, g_ref[...], beta_ref[...], inv_b)
        a1 = _elu(h1 * scale + shift)
        h2 = jnp.dot(a1.astype(jnp.bfloat16), w2_ref[...],
                     preferred_element_type=jnp.float32) + b2_ref[...]
        o_ref[...] = _elu(h2).astype(o_ref.dtype)
    return fused_kernel


# ---------------------------------------------------------------------------
# Pass 1 (large B): per-tile partial sum / sum-of-squares of h1 = x @ w1
# ---------------------------------------------------------------------------
def _stats_kernel(x_ref, w1_ref, stat_ref):
    h1 = jnp.dot(x_ref[...].astype(jnp.bfloat16), w1_ref[...],
                 preferred_element_type=jnp.float32)
    s = jnp.sum(h1, axis=0, keepdims=True)
    ss = jnp.sum(h1 * h1, axis=0, keepdims=True)
    stat_ref[...] = jnp.concatenate([s, ss], axis=0)     # (2, H1_PAD)


# ---------------------------------------------------------------------------
# Pass 2 (large B): fc1 -> BN(scale/shift from s, ss) -> ELU -> fc2 -> ELU
# ---------------------------------------------------------------------------
def _make_fwd_kernel(inv_b):
    def fwd_kernel(x_ref, w1_ref, s_ref, ss_ref, g_ref, beta_ref,
                   w2_ref, b2_ref, o_ref):
        scale, shift = _bn_scale_shift(s_ref[...], ss_ref[...],
                                       g_ref[...], beta_ref[...], inv_b)
        h1 = jnp.dot(x_ref[...].astype(jnp.bfloat16), w1_ref[...],
                     preferred_element_type=jnp.float32)
        a1 = _elu(h1 * scale + shift)
        h2 = jnp.dot(a1.astype(jnp.bfloat16), w2_ref[...],
                     preferred_element_type=jnp.float32) + b2_ref[...]
        o_ref[...] = _elu(h2).astype(o_ref.dtype)
    return fwd_kernel


def _fcbody_forward(x, padded_params):
    """x: (B, STATE_DIM) f32 (or bf16) -> (B, H2) f32."""
    w1p, g1p, beta1p, w2p, b2p = padded_params
    B = x.shape[0]
    inv_b = 1.0 / float(B)
    vec_spec = pl.BlockSpec((1, H1_PAD), lambda i: (0, 0))

    if B <= FUSED_MAX_ROWS:
        # ---- fused single-kernel fast path ----
        B_pad = _round_up(max(B, 8), 8)
        x_in = jnp.pad(x, ((0, B_pad - B), (0, 0))) if B_pad != B else x
        out = pl.pallas_call(
            _make_fused_kernel(inv_b),
            out_shape=jax.ShapeDtypeStruct((B_pad, H2), jnp.float32),
            grid_spec=pltpu.PrefetchScalarGridSpec(
                num_scalar_prefetch=0,
                grid=(1,),
                in_specs=[
                    pl.BlockSpec((B_pad, STATE_DIM), lambda i: (0, 0)),   # x
                    pl.BlockSpec((STATE_DIM, H1_PAD), lambda i: (0, 0)),  # w1
                    vec_spec,                                             # gamma
                    vec_spec,                                             # beta
                    pl.BlockSpec((H1_PAD, H2), lambda i: (0, 0)),         # w2
                    pl.BlockSpec((1, H2), lambda i: (0, 0)),              # b2
                ],
                out_specs=pl.BlockSpec((B_pad, H2), lambda i: (0, 0)),
            ),
            compiler_params=pltpu.CompilerParams(
                dimension_semantics=("arbitrary",),
                vmem_limit_bytes=VMEM_LIMIT),
        )(x_in, w1p, g1p, beta1p, w2p, b2p)
        return out if B_pad == B else out[:B]

    # ---- two-pass path: balanced tiles, >= 2 parallel grid steps ----
    n_tiles = max(2, -(-B // MAX_BATCH_TILE))
    TB = _round_up(-(-B // n_tiles), 8)
    B_pad = n_tiles * TB
    x_in = jnp.pad(x, ((0, B_pad - B), (0, 0))) if B_pad != B else x

    # Pass 1: per-tile partial (sum, sumsq); fully parallel (both v7x TCs).
    stats = pl.pallas_call(
        _stats_kernel,
        out_shape=jax.ShapeDtypeStruct((n_tiles, 2, H1_PAD), jnp.float32),
        grid_spec=pltpu.PrefetchScalarGridSpec(
            num_scalar_prefetch=0,
            grid=(n_tiles,),
            in_specs=[
                pl.BlockSpec((TB, STATE_DIM), lambda i: (i, 0)),      # x tile
                pl.BlockSpec((STATE_DIM, H1_PAD), lambda i: (0, 0)),  # w1
            ],
            out_specs=pl.BlockSpec((None, 2, H1_PAD), lambda i: (i, 0, 0)),
        ),
        compiler_params=pltpu.CompilerParams(
            dimension_semantics=("parallel",),
            vmem_limit_bytes=VMEM_LIMIT),
    )(x_in, w1p)
    tot = jnp.sum(stats, axis=0)          # tiny (2, 128) reduce in XLA
    s, ss = tot[0:1], tot[1:2]

    # Pass 2: fc1 + BN-fold + ELU + fc2 + ELU, fully parallel over batch tiles.
    out = pl.pallas_call(
        _make_fwd_kernel(inv_b),
        out_shape=jax.ShapeDtypeStruct((B_pad, H2), jnp.float32),
        grid_spec=pltpu.PrefetchScalarGridSpec(
            num_scalar_prefetch=0,
            grid=(n_tiles,),
            in_specs=[
                pl.BlockSpec((TB, STATE_DIM), lambda i: (i, 0)),      # x tile
                pl.BlockSpec((STATE_DIM, H1_PAD), lambda i: (0, 0)),  # w1
                vec_spec,                                             # sum
                vec_spec,                                             # sumsq
                vec_spec,                                             # gamma
                vec_spec,                                             # beta
                pl.BlockSpec((H1_PAD, H2), lambda i: (0, 0)),         # w2
                pl.BlockSpec((1, H2), lambda i: (0, 0)),              # b2
            ],
            out_specs=pl.BlockSpec((TB, H2), lambda i: (i, 0)),
        ),
        compiler_params=pltpu.CompilerParams(
            dimension_semantics=("parallel",),                        # megacore
            vmem_limit_bytes=VMEM_LIMIT),
    )(x_in, w1p, s, ss, g1p, beta1p, w2p, b2p)
    return out if B_pad == B else out[:B]


fcbody_forward = jax.jit(_fcbody_forward)


# ---------------------------------------------------------------------------
# Parameter construction (PyTorch defaults) and host-side padding
# ---------------------------------------------------------------------------
def init_params(key):
    """nn.Linear default init U(-1/sqrt(fan_in), +lim) and BatchNorm1d defaults
    (gamma=1, beta=0).  Weights stored as (in_features, out_features)."""
    k1, k2, k3, k4 = jax.random.split(key, 4)
    lim1 = 1.0 / np.sqrt(STATE_DIM)
    w1 = jax.random.uniform(k1, (STATE_DIM, H1), jnp.float32, -lim1, lim1)
    b1 = jax.random.uniform(k2, (1, H1), jnp.float32, -lim1, lim1)
    g1 = jnp.ones((1, H1), jnp.float32)
    beta1 = jnp.zeros((1, H1), jnp.float32)
    lim2 = 1.0 / np.sqrt(H1)
    w2 = jax.random.uniform(k3, (H1, H2), jnp.float32, -lim2, lim2)
    b2 = jax.random.uniform(k4, (1, H2), jnp.float32, -lim2, lim2)
    return (w1, b1, g1, beta1, w2, b2)


def pad_params(params):
    """Lane-pad the hidden-64 dim to 128 with zeros; bf16 for the MXU weight
    operands.  fc1 bias is dropped: train-mode BN makes the forward output
    independent of it (it only affects the unimplemented running stats)."""
    w1, _b1, g1, beta1, w2, b2 = params
    w1p = jnp.pad(w1, ((0, 0), (0, H1_PAD - H1))).astype(jnp.bfloat16)
    g1p = jnp.pad(g1, ((0, 0), (0, H1_PAD - H1)))
    beta1p = jnp.pad(beta1, ((0, 0), (0, H1_PAD - H1)))
    w2p = jnp.pad(w2, ((0, H1_PAD - H1), (0, 0))).astype(jnp.bfloat16)
    return (w1p, g1p, beta1p, w2p, b2)


def _reference(x, params):
    """Pure-f32 reference matching PyTorch FCBody.forward in training mode."""
    w1, b1, g1, beta1, w2, b2 = params
    h1 = x @ w1 + b1
    mu = h1.mean(axis=0, keepdims=True)
    var = ((h1 - mu) ** 2).mean(axis=0, keepdims=True)   # biased variance
    h1n = (h1 - mu) / jnp.sqrt(var + BN_EPS) * g1 + beta1
    a1 = _elu(h1n)
    h2 = a1 @ w2 + b2
    return _elu(h2)


if __name__ == "__main__":
    key = jax.random.PRNGKey(0)
    kx, kp, kx2 = jax.random.split(key, 3)
    params = init_params(kp)
    padded = pad_params(params)

    # Small batch -> fused single-kernel path.
    B = 8
    x = jax.random.normal(kx, (B, STATE_DIM), jnp.float32)
    out = jax.block_until_ready(fcbody_forward(x, padded))
    assert out.shape == (B, H2)
    ref = _reference(x, params)
    # MXU inputs are bf16 (f32 accumulation) -> loosened tolerance vs f32 ref.
    np.testing.assert_allclose(np.asarray(out), np.asarray(ref),
                               rtol=5e-2, atol=5e-2)

    # Larger batch -> two-pass path (balanced tiles, parallel grid steps).
    B2 = 1100
    x2 = jax.random.normal(kx2, (B2, STATE_DIM), jnp.float32)
    out2 = jax.block_until_ready(fcbody_forward(x2, padded))
    assert out2.shape == (B2, H2)
    ref2 = _reference(x2, params)
    np.testing.assert_allclose(np.asarray(out2), np.asarray(ref2),
                               rtol=5e-2, atol=5e-2)

    print("KERNEL_OK")
</pallas_src>

<mosaic_0001>
module attributes {stable_mosaic.version = 11 : i64} {
  func.func @fused_kernel(%arg0: i32, %arg1: memref<8x32xf32, #tpu.memory_space<vmem>>, %arg2: memref<32x128xbf16, #tpu.memory_space<vmem>>, %arg3: memref<1x128xf32, #tpu.memory_space<vmem>>, %arg4: memref<1x128xf32, #tpu.memory_space<vmem>>, %arg5: memref<128x88xbf16, #tpu.memory_space<vmem>>, %arg6: memref<1x88xf32, #tpu.memory_space<vmem>>, %arg7: memref<8x88xf32, #tpu.memory_space<vmem>>) attributes {dimension_semantics = [#tpu.dimension_semantics<arbitrary>], iteration_bounds = array<i64: 1>, scalar_prefetch = 0 : i64, scratch_operands = 0 : i64, tpu.core_type = #tpu.core_type<tc>, window_params = [{pipeline_mode = #tpu.pipeline_mode<synchronous>, transform_indices = @transform_0, window_bounds = array<i64: 8, 32>}, {pipeline_mode = #tpu.pipeline_mode<synchronous>, transform_indices = @transform_1, window_bounds = array<i64: 32, 128>}, {pipeline_mode = #tpu.pipeline_mode<synchronous>, transform_indices = @transform_2, window_bounds = array<i64: 1, 128>}, {pipeline_mode = #tpu.pipeline_mode<synchronous>, transform_indices = @transform_3, window_bounds = array<i64: 1, 128>}, {pipeline_mode = #tpu.pipeline_mode<synchronous>, transform_indices = @transform_4, window_bounds = array<i64: 128, 88>}, {pipeline_mode = #tpu.pipeline_mode<synchronous>, transform_indices = @transform_5, window_bounds = array<i64: 1, 88>}, {pipeline_mode = #tpu.pipeline_mode<synchronous>, transform_indices = @transform_6, window_bounds = array<i64: 8, 88>}]} {
    %c0 = arith.constant 0 : index
    %c0_0 = arith.constant 0 : index
    %0 = vector.load %arg1[%c0, %c0_0] : memref<8x32xf32, #tpu.memory_space<vmem>>, vector<8x32xf32>
    %1 = arith.truncf %0 : vector<8x32xf32> to vector<8x32xbf16>
    %c0_1 = arith.constant 0 : index
    %c0_2 = arith.constant 0 : index
    %2 = vector.load %arg2[%c0_1, %c0_2] : memref<32x128xbf16, #tpu.memory_space<vmem>>, vector<32x128xbf16>
    %cst = arith.constant dense<0.000000e+00> : vector<8x128xf32>
    %3 = tpu.matmul %1, %2, %cst {dimension_numbers = #tpu.dot_dimension_numbers<[1], [0], [0], [1], [0, 0, 1, 1], [], []>} : vector<8x32xbf16>, vector<32x128xbf16>, vector<8x128xf32> -> vector<8x128xf32>
    %cst_3 = arith.constant dense<0.000000e+00> : vector<128xf32>
    %4 = vector.multi_reduction <add>, %3, %cst_3 [0] : vector<8x128xf32> to vector<128xf32>
    %5 = vector.shape_cast %4 : vector<128xf32> to vector<1x128xf32>
    %6 = arith.mulf %3, %3 : vector<8x128xf32>
    %cst_4 = arith.constant dense<0.000000e+00> : vector<128xf32>
    %7 = vector.multi_reduction <add>, %6, %cst_4 [0] : vector<8x128xf32> to vector<128xf32>
    %8 = vector.shape_cast %7 : vector<128xf32> to vector<1x128xf32>
    %c0_5 = arith.constant 0 : index
    %c0_6 = arith.constant 0 : index
    %9 = vector.load %arg3[%c0_5, %c0_6] : memref<1x128xf32, #tpu.memory_space<vmem>>, vector<1x128xf32>
    %c0_7 = arith.constant 0 : index
    %c0_8 = arith.constant 0 : index
    %10 = vector.load %arg4[%c0_7, %c0_8] : memref<1x128xf32, #tpu.memory_space<vmem>>, vector<1x128xf32>
    %cst_9 = arith.constant 1.250000e-01 : f32
    %11 = vector.broadcast %cst_9 : f32 to vector<1x128xf32>
    %12 = arith.mulf %5, %11 : vector<1x128xf32>
    %cst_10 = arith.constant 1.250000e-01 : f32
    %13 = vector.broadcast %cst_10 : f32 to vector<1x128xf32>
    %14 = arith.mulf %8, %13 : vector<1x128xf32>
    %15 = arith.mulf %12, %12 : vector<1x128xf32>
    %16 = arith.subf %14, %15 : vector<1x128xf32>
    %cst_11 = arith.constant 0.000000e+00 : f32
    %17 = vector.broadcast %cst_11 : f32 to vector<1x128xf32>
    %18 = arith.maximumf %16, %17 : vector<1x128xf32>
    %cst_12 = arith.constant 9.99999974E-6 : f32
    %19 = vector.broadcast %cst_12 : f32 to vector<1x128xf32>
    %20 = arith.addf %18, %19 : vector<1x128xf32>
    %21 = math.rsqrt %20 : vector<1x128xf32>
    %22 = arith.mulf %9, %21 : vector<1x128xf32>
    %23 = arith.mulf %12, %22 : vector<1x128xf32>
    %24 = arith.subf %10, %23 : vector<1x128xf32>
    %25 = vector.broadcast %22 : vector<1x128xf32> to vector<8x128xf32>
    %26 = arith.mulf %3, %25 : vector<8x128xf32>
    %27 = vector.broadcast %24 : vector<1x128xf32> to vector<8x128xf32>
    %28 = arith.addf %26, %27 : vector<8x128xf32>
    %cst_13 = arith.constant 0.000000e+00 : f32
    %29 = vector.broadcast %cst_13 : f32 to vector<8x128xf32>
    %30 = arith.cmpf ogt, %28, %29 : vector<8x128xf32>
    %cst_14 = arith.constant 0.000000e+00 : f32
    %31 = vector.broadcast %cst_14 : f32 to vector<8x128xf32>
    %32 = arith.minimumf %28, %31 : vector<8x128xf32>
    %33 = math.exp %32 : vector<8x128xf32>
    %cst_15 = arith.constant 1.000000e+00 : f32
    %34 = vector.broadcast %cst_15 : f32 to vector<8x128xf32>
    %35 = arith.subf %33, %34 : vector<8x128xf32>
    %36 = arith.select %30, %28, %35 : vector<8x128xi1>, vector<8x128xf32>
    %37 = arith.truncf %36 : vector<8x128xf32> to vector<8x128xbf16>
    %c0_16 = arith.constant 0 : index
    %c0_17 = arith.constant 0 : index
    %38 = vector.load %arg5[%c0_16, %c0_17] : memref<128x88xbf16, #tpu.memory_space<vmem>>, vector<128x88xbf16>
    %cst_18 = arith.constant dense<0.000000e+00> : vector<8x88xf32>
    %39 = tpu.matmul %37, %38, %cst_18 {dimension_numbers = #tpu.dot_dimension_numbers<[1], [0], [0], [1], [0, 0, 1, 1], [], []>} : vector<8x128xbf16>, vector<128x88xbf16>, vector<8x88xf32> -> vector<8x88xf32>
    %c0_19 = arith.constant 0 : index
    %c0_20 = arith.constant 0 : index
    %40 = vector.load %arg6[%c0_19, %c0_20] : memref<1x88xf32, #tpu.memory_space<vmem>>, vector<1x88xf32>
    %41 = vector.broadcast %40 : vector<1x88xf32> to vector<8x88xf32>
    %42 = arith.addf %39, %41 : vector<8x88xf32>
    %cst_21 = arith.constant 0.000000e+00 : f32
    %43 = vector.broadcast %cst_21 : f32 to vector<8x88xf32>
    %44 = arith.cmpf ogt, %42, %43 : vector<8x88xf32>
    %cst_22 = arith.constant 0.000000e+00 : f32
    %45 = vector.broadcast %cst_22 : f32 to vector<8x88xf32>
    %46 = arith.minimumf %42, %45 : vector<8x88xf32>
    %47 = math.exp %46 : vector<8x88xf32>
    %cst_23 = arith.constant 1.000000e+00 : f32
    %48 = vector.broadcast %cst_23 : f32 to vector<8x88xf32>
    %49 = arith.subf %47, %48 : vector<8x88xf32>
    %50 = arith.select %44, %42, %49 : vector<8x88xi1>, vector<8x88xf32>
    %c0_24 = arith.constant 0 : index
    %c0_25 = arith.constant 0 : index
    %51 = vector.load %arg7[%c0_24, %c0_25] : memref<8x88xf32, #tpu.memory_space<vmem>>, vector<8x88xf32>
    tpu.vector_store %arg7[%c0_24, %c0_25], %50 {strides = array<i32>} : memref<8x88xf32, #tpu.memory_space<vmem>>, vector<8x88xf32>,
    return
  }
  func.func @transform_0(%arg0: i32) -> (i32, i32) {
    %c0_i32 = arith.constant 0 : i32
    %c0_i32_0 = arith.constant 0 : i32
    %c0_i32_1 = arith.constant 0 : i32
    return %c0_i32, %c0_i32_0 : i32, i32
  }
  func.func @transform_1(%arg0: i32) -> (i32, i32) {
    %c0_i32 = arith.constant 0 : i32
    %c0_i32_0 = arith.constant 0 : i32
    %c0_i32_1 = arith.constant 0 : i32
    return %c0_i32, %c0_i32_0 : i32, i32
  }
  func.func @transform_2(%arg0: i32) -> (i32, i32) {
    %c0_i32 = arith.constant 0 : i32
    %c0_i32_0 = arith.constant 0 : i32
    %c0_i32_1 = arith.constant 0 : i32
    return %c0_i32, %c0_i32_0 : i32, i32
  }
  func.func @transform_3(%arg0: i32) -> (i32, i32) {
    %c0_i32 = arith.constant 0 : i32
    %c0_i32_0 = arith.constant 0 : i32
    %c0_i32_1 = arith.constant 0 : i32
    return %c0_i32, %c0_i32_0 : i32, i32
  }
  func.func @transform_4(%arg0: i32) -> (i32, i32) {
    %c0_i32 = arith.constant 0 : i32
    %c0_i32_0 = arith.constant 0 : i32
    %c0_i32_1 = arith.constant 0 : i32
    return %c0_i32, %c0_i32_0 : i32, i32
  }
  func.func @transform_5(%arg0: i32) -> (i32, i32) {
    %c0_i32 = arith.constant 0 : i32
    %c0_i32_0 = arith.constant 0 : i32
    %c0_i32_1 = arith.constant 0 : i32
    return %c0_i32, %c0_i32_0 : i32, i32
  }
  func.func @transform_6(%arg0: i32) -> (i32, i32) {
    %c0_i32 = arith.constant 0 : i32
    %c0_i32_0 = arith.constant 0 : i32
    %c0_i32_1 = arith.constant 0 : i32
    return %c0_i32, %c0_i32_0 : i32, i32
  }
}

</mosaic_0001>

<llo_original>
// kernel: _fcbody_forward.1
$region0: #{_fcbody_forward.1}
  #allocation0 [shape = 'u32[]', space=smem, size = 0x4, offset = 0x4, fixed_abs, tag = 'smem constant byte address 0x4 - core index']
  #allocation1 [shape = 'u32[144,128]{1,0:T(1,128)}', space=vmem, size = 0x12000, scoped, tag = 'internal scratch']
  %s0 = inlined_call_operand.vmem [shape: f32[8,32], index: 0, kind: input, shape index: {}]
  %s1 = inlined_call_operand.vmem [shape: bf16[32,128], index: 1, kind: input, shape index: {}]
  %s2 = inlined_call_operand.vmem [shape: f32[1,128], index: 2, kind: input, shape index: {}]
  %s3 = inlined_call_operand.vmem [shape: f32[1,128], index: 3, kind: input, shape index: {}]
  %s4 = inlined_call_operand.vmem [shape: bf16[128,88], index: 4, kind: input, shape index: {}]
  %s5 = inlined_call_operand.vmem [shape: f32[1,88], index: 5, kind: input, shape index: {}]
  %s6 = inlined_call_operand.hbm [shape: f32[8,88], index: 6, kind: output, shape index: {}]
  %s7 = sld [smem:[#allocation0]]
  $region34: #{_fcbody_forward.1} parent=0
    _
  %s9 = ssub.s32 1, %s7
  %s10 = scalar_select 0, %s9, %s7
  $region1: #{_fcbody_forward.1} parent=0
    #allocation2 [shape = 'u8[4096]{0}', space=vmem, size = 0x1000, scoped, tag = 'output window, operand 0, single buffered']
    #allocation3 [shape = 's32[1]{0}', space=sflag, size = 0x4, scoped, tag = 'scoped memory for _fcbody_forward.1']
    %11 = vsyncpa [#allocation3], 0
    // Predicated region
    $region2: #{_fcbody_forward.1} parent=1 // pred_check
      _
    $region3: #{_fcbody_forward.1} parent=1 // pred_check_branch
      %13 = sbr.rel (0) target = $region5
    $region4: #{_fcbody_forward.1} parent=1 // pred_region
      _
    $region5: #{_fcbody_forward.1} parent=1 // pred_fallthru
      _
    // Predicated region
    $region6: #{_fcbody_forward.1} parent=1 // pred_check
      _
    $region7: #{_fcbody_forward.1} parent=1 // pred_check_branch
      %15 = sbr.rel (0) target = $region9
    $region8: #{_fcbody_forward.1} parent=1 // pred_region
      _
    $region9: #{_fcbody_forward.1} parent=1 // pred_fallthru
      _
    // Predicated region
    $region10: #{_fcbody_forward.1} parent=1 // pred_check
      _
    $region11: #{_fcbody_forward.1} parent=1 // pred_check_branch
      %17 = sbr.rel (0) target = $region13
    $region12: #{_fcbody_forward.1} parent=1 // pred_region
      _
    $region13: #{_fcbody_forward.1} parent=1 // pred_fallthru
      _
    // Predicated region
    $region14: #{_fcbody_forward.1} parent=1 // pred_check
      _
    $region15: #{_fcbody_forward.1} parent=1 // pred_check_branch
      %19 = sbr.rel (0) target = $region17
    $region16: #{_fcbody_forward.1} parent=1 // pred_region
      _
    $region17: #{_fcbody_forward.1} parent=1 // pred_fallthru
      _
    // Predicated region
    $region18: #{_fcbody_forward.1} parent=1 // pred_check
      _
    $region19: #{_fcbody_forward.1} parent=1 // pred_check_branch
      %21 = sbr.rel (0) target = $region21
    $region20: #{_fcbody_forward.1} parent=1 // pred_region
      _
    $region21: #{_fcbody_forward.1} parent=1 // pred_fallthru
      _
    // Predicated region
    $region22: #{_fcbody_forward.1} parent=1 // pred_check
      _
    $region23: #{_fcbody_forward.1} parent=1 // pred_check_branch
      %23 = sbr.rel (0) target = $region25
    $region24: #{_fcbody_forward.1} parent=1 // pred_region
      _
    $region25: #{_fcbody_forward.1} parent=1 // pred_fallthru
      _
    %v25 = vld [vmem:[%s0] sm:$0xff]
    %v26 = vpack.c.bf16 %v25, %v25
    %v27 = vld [vmem:[%s1] sm:$0xf]
    %v28 = vld [vmem:[%s1 + $0x4] sm:$0xf]
    %v29 = vld [vmem:[%s1 + $0x8] sm:$0xf]
    %v30 = vld [vmem:[%s1 + $0xc] sm:$0xf]
    %v35 = vunpack.c.l.b16 %v27
    %v36 = vunpack.c.l.b16 %v28
    %v37 = vunpack.c.l.b16 %v29
    %v38 = vunpack.c.l.b16 %v30
    %v39 = vpack.c.b16 %v36, %v35
    %v40 = vpack.c.b16 %v38, %v37
    %vm43 = vcmask 261120
    %v45 = vsel %vm43, %v26, 0
    %47 = vmatprep.subr.bf16.mxu0 0
    %48 = vmatpush1.bf16.msra.mxu0 %v39
    %49 = vmatprep.subr.bf16.mxu0 0
    %50 = vmatpush1.bf16.msra.mxu0 %v40
    %51 = vmatprep.subr.bf16.mxu0 0
    %52 = vmatpush1.bf16.msra.mxu0 0
    %53 = vmatprep.subr.bf16.mxu0 0
    %54 = vmatpush1.bf16.msra.mxu0 0
    %55 = vmatprep.subr.bf16.mxu0 0
    %56 = vmatpush1.bf16.msra.mxu0 0
    %57 = vmatprep.subr.bf16.mxu0 0
    %58 = vmatpush1.bf16.msra.mxu0 0
    %59 = vmatprep.subr.bf16.mxu0 0
    %60 = vmatpush1.bf16.msra.mxu0 0
    %61 = vmatprep.subr.bf16.mxu0 0
    %62 = vmatpush1.bf16.msra.mxu0 0
    %63 = vmatprep.subr.bf16.mxu0 0
    %64 = vmatpush1.bf16.msra.mxu0 0
    %65 = vmatprep.subr.bf16.mxu0 0
    %66 = vmatpush1.bf16.msra.mxu0 0
    %67 = vmatprep.subr.bf16.mxu0 0
    %68 = vmatpush1.bf16.msra.mxu0 0
    %69 = vmatprep.subr.bf16.mxu0 0
    %70 = vmatpush1.bf16.msra.mxu0 0
    %71 = vmatprep.subr.bf16.mxu0 0
    %72 = vmatpush1.bf16.msra.mxu0 0
    %73 = vmatprep.subr.bf16.mxu0 0
    %74 = vmatpush1.bf16.msra.mxu0 0
    %75 = vmatprep.subr.bf16.mxu0 0
    %76 = vmatpush1.bf16.msra.mxu0 0
    %77 = vmatprep.subr.bf16.mxu0 0
    %78 = vmatpush1.bf16.msra.mxu0 0
    %79 = vmatprep.mubr.bf16.mxu0 0
    %80 = vmatmul.mubr.bf16.gmra.mrb[0].mxu0 %v45
    %v81 = vpop.f32.mrb[0].mxu0
    %v82 = vadd.f32 0.0, %v81
    %v83 = vpop.f32.mrb[0].mxu0
    %v84 = vpop.f32.mrb[0].mxu0
    %v85 = vpop.f32.mrb[0].mxu0
    %86 = vdwg.mxu0
    %v87 = vrot.slane %v82, 4
    %v88 = vadd.f32 %v82, %v87
    %v89 = vrot.slane %v88, 2
    %v90 = vadd.f32 %v88, %v89
    %v91 = vrot.slane %v90, 1
    %v92 = vadd.f32 %v90, %v91
    %v93 = vmul.f32 %v82, %v82
    %v94 = vrot.slane %v93, 4
    %v95 = vadd.f32 %v93, %v94
    %v96 = vrot.slane %v95, 2
    %v97 = vadd.f32 %v95, %v96
    %v98 = vrot.slane %v97, 1
    %v99 = vadd.f32 %v97, %v98
    %v100 = vld [vmem:[%s2] sm:$0x1]
    %v101 = vld [vmem:[%s3] sm:$0x1]
    %v102 = vmul.f32 %v92, 0.125
    %v103 = vmul.f32 %v99, 0.125
    %v104 = vmul.f32 %v102, %v102
    %v105 = vsub.f32 %v103, %v104
    %v106 = vmax.f32 %v105, 0.0
    %v107 = vadd.f32 %v106, 1e-05
    %v108 = vrsqrt.pop %v107
    %v109 = vmul.f32 %v100, %v108
    %v110 = vmul.f32 %v102, %v109
    %v111 = vsub.f32 %v101, %v110
    %v113 = vlaneseq
    %v114 = vshrl.u32 %v113, 7
    %v115 = vsub.s32 0, %v114
    %v116 = vrot.slane %v109, %v115
    %v118 = vmul.f32 %v82, %v116
    %v120 = vlaneseq
    %v121 = vshrl.u32 %v120, 7
    %v122 = vsub.s32 0, %v121
    %v123 = vrot.slane %v111, %v122
    %v125 = vadd.f32 %v118, %v123
    %vm126 = vcmp.gt.f32.partialorder %v125, 0.0
    %v127 = vmin.f32 %v125, 0.0
    %v128 = vmul.f32 %v127, 1.442695
    %v129 = vpow.pop %v128
    %v130 = vsub.f32 %v129, 1.0
    %v131 = vsel %vm126, %v125, %v130
    %v132 = vpack.c.bf16 %v131, %v131
    %v133 = vld [vmem:[%s4] sm:$0xf]
    %v134 = vld [vmem:[%s4 + $0x4] sm:$0xf]
    %v135 = vld [vmem:[%s4 + $0x8] sm:$0xf]
    %v136 = vld [vmem:[%s4 + $0xc] sm:$0xf]
    %v137 = vld [vmem:[%s4 + $0x10] sm:$0xf]
    %v138 = vld [vmem:[%s4 + $0x14] sm:$0xf]
    %v139 = vld [vmem:[%s4 + $0x18] sm:$0xf]
    %v140 = vld [vmem:[%s4 + $0x1c] sm:$0xf]
    %v141 = vld [vmem:[%s4 + $0x20] sm:$0xf]
    %v142 = vld [vmem:[%s4 + $0x24] sm:$0xf]
    %v143 = vld [vmem:[%s4 + $0x28] sm:$0xf]
    %v144 = vld [vmem:[%s4 + $0x2c] sm:$0xf]
    %v145 = vld [vmem:[%s4 + $0x30] sm:$0xf]
    %v146 = vld [vmem:[%s4 + $0x34] sm:$0xf]
    %v147 = vld [vmem:[%s4 + $0x38] sm:$0xf]
    %v148 = vld [vmem:[%s4 + $0x3c] sm:$0xf]
    %v149 = vld [vmem:[%s5] sm:$0x1]
    %v151 = vlaneseq
    %v152 = vshrl.u32 %v151, 7
    %v153 = vsub.s32 0, %v152
    %v154 = vrot.slane %v149, %v153
    %v172 = vunpack.c.l.b16 %v133
    %v173 = vunpack.c.l.b16 %v134
    %v174 = vunpack.c.l.b16 %v135
    %v175 = vunpack.c.l.b16 %v136
    %v176 = vunpack.c.l.b16 %v137
    %v177 = vunpack.c.l.b16 %v138
    %v178 = vunpack.c.l.b16 %v139
    %v179 = vunpack.c.l.b16 %v140
    %v180 = vunpack.c.l.b16 %v141
    %v181 = vunpack.c.l.b16 %v142
    %v182 = vunpack.c.l.b16 %v143
    %v183 = vunpack.c.l.b16 %v144
    %v184 = vunpack.c.l.b16 %v145
    %v185 = vunpack.c.l.b16 %v146
    %v186 = vunpack.c.l.b16 %v147
    %v187 = vunpack.c.l.b16 %v148
    %v188 = vpack.c.b16 %v173, %v172
    %v189 = vpack.c.b16 %v175, %v174
    %v190 = vpack.c.b16 %v177, %v176
    %v191 = vpack.c.b16 %v179, %v178
    %v192 = vpack.c.b16 %v181, %v180
    %v193 = vpack.c.b16 %v183, %v182
    %v194 = vpack.c.b16 %v185, %v184
    %v195 = vpack.c.b16 %v187, %v186
    %204 = vmatprep.subr.bf16.mxu0 0
    %205 = vmatpush1.bf16.msra.mxu0 %v188
    %206 = vmatprep.subr.bf16.mxu0 0
    %207 = vmatpush1.bf16.msra.mxu0 %v189
    %208 = vmatprep.subr.bf16.mxu0 0
    %209 = vmatpush1.bf16.msra.mxu0 %v190
    %210 = vmatprep.subr.bf16.mxu0 0
    %211 = vmatpush1.bf16.msra.mxu0 %v191
    %212 = vmatprep.subr.bf16.mxu0 0
    %213 = vmatpush1.bf16.msra.mxu0 %v192
    %214 = vmatprep.subr.bf16.mxu0 0
    %215 = vmatpush1.bf16.msra.mxu0 %v193
    %216 = vmatprep.subr.bf16.mxu0 0
    %217 = vmatpush1.bf16.msra.mxu0 %v194
    %218 = vmatprep.subr.bf16.mxu0 0
    %219 = vmatpush1.bf16.msra.mxu0 %v195
    %220 = vmatprep.subr.bf16.mxu0 0
    %221 = vmatpush1.bf16.msra.mxu0 0
    %222 = vmatprep.subr.bf16.mxu0 0
    %223 = vmatpush1.bf16.msra.mxu0 0
    %224 = vmatprep.subr.bf16.mxu0 0
    %225 = vmatpush1.bf16.msra.mxu0 0
    %226 = vmatprep.subr.bf16.mxu0 0
    %227 = vmatpush1.bf16.msra.mxu0 0
    %228 = vmatprep.subr.bf16.mxu0 0
    %229 = vmatpush1.bf16.msra.mxu0 0
    %230 = vmatprep.subr.bf16.mxu0 0
    %231 = vmatpush1.bf16.msra.mxu0 0
    %232 = vmatprep.subr.bf16.mxu0 0
    %233 = vmatpush1.bf16.msra.mxu0 0
    %234 = vmatprep.subr.bf16.mxu0 0
    %235 = vmatpush1.bf16.msra.mxu0 0
    %236 = vmatprep.mubr.bf16.mxu0 0
    %237 = vmatmul.mubr.bf16.gmra.mrb[0].mxu0 %v132
    %v238 = vpop.f32.mrb[0].mxu0
    %v239 = vadd.f32 %v154, %v238
    %v240 = vpop.f32.mrb[0].mxu0
    %v241 = vpop.f32.mrb[0].mxu0
    %v242 = vpop.f32.mrb[0].mxu0
    %243 = vdwg.mxu0
    %vm244 = vcmp.gt.f32.partialorder %v239, 0.0
    %v245 = vmin.f32 %v239, 0.0
    %v246 = vmul.f32 %v245, 1.442695
    %v247 = vpow.pop %v246
    %v248 = vsub.f32 %v247, 1.0
    %v249 = vsel %vm244, %v239, %v248
    %vm250 = vcmask 719872
    %251 = vst.msk [vmem:[#allocation2] sm:$0xff] %vm250, %v249
    // Predicated region
    $region26: #{_fcbody_forward.1} parent=1 // pred_check
      _
    $region27: #{_fcbody_forward.1} parent=1 // pred_check_branch
      %253 = sbr.rel (0) target = $region29
    $region28: #{_fcbody_forward.1} parent=1 // pred_region
      %s255 = ssub.s32 128, 128
      %256 = vsyncadd [#allocation3], %s255
      %s258 = sshll.u32 [#allocation2], 4
      %s259 = int_to_ptr.vmem [resolvable:$true] %s258
      %261 = dma.vmem_to_hbm [thread:$0]  %s259, 128, %s6, [#allocation3]
    $region29: #{_fcbody_forward.1} parent=1 // pred_fallthru
      _
    // Predicated region
    $region30: #{_fcbody_forward.1} parent=1 // pred_check
      _
    $region31: #{_fcbody_forward.1} parent=1 // pred_check_branch
      %263 = sbr.rel (0) target = $region33
    $region32: #{_fcbody_forward.1} parent=1 // pred_region
      %264 = dma.done [#allocation3], 128
    $region33: #{_fcbody_forward.1} parent=1 // pred_fallthru
      _
    %265 = vsyncpa [#allocation3], 1

</llo_original>
